<compile_context>
chip_gen: v5e
topology: v5e:2x2
jax: 0.10.0
libtpu: 0.0.40
codegen_flags: <defaults>
</compile_context>

<pallas_src>
import functools

import jax
import jax.numpy as jnp
from jax.experimental import pallas as pl
from jax.experimental.pallas import tpu as pltpu

MARGIN = 0.1

_ACC_ROWS = 8      # sublane-aligned accumulator tile
_ACC_LANES = 128   # lane-aligned accumulator tile


def _triplet_loss_kernel(a_ref, p_ref, n_ref, acc_ref, *, margin,
                         blocks_per_core, block_rows, batch):
    c = pl.program_id(0)          # partial-sum / core index ("parallel")
    i = pl.program_id(1)          # batch-block index ("arbitrary" reduction)

    @pl.when(i == 0)
    def _init():
        acc_ref[...] = jnp.zeros_like(acc_ref)

    a = a_ref[...].astype(jnp.float32)
    p = p_ref[...].astype(jnp.float32)
    n = n_ref[...].astype(jnp.float32)

    dp = a - p
    dn = a - n
    # Fused single cross-lane reduction: sum((a-p)^2 - (a-n)^2) over features.
    diff = dp * dp - dn * dn                                   # (TB, D)
    row = jnp.sum(diff, axis=1, keepdims=True)                 # (TB, 1)
    loss = jnp.maximum(row + margin, 0.0)                      # relu, (TB, 1)

    # Mask rows outside the real batch (ragged last block and fully
    # out-of-range steps whose input index_map was clamped).
    gblk = c * blocks_per_core + i                             # unclamped block id
    row_ids = gblk * block_rows + jax.lax.broadcasted_iota(
        jnp.int32, loss.shape, 0)
    loss = jnp.where(row_ids < batch, loss, 0.0)

    # Accumulate this block's loss sum into the core's resident accumulator
    # ((1,1) broadcasts across the (8,128) tile).
    acc_ref[...] += jnp.sum(loss, axis=0, keepdims=True)


def triplet_loss(anchor, positive, negative, margin=MARGIN, size_average=True):
    """anchor/positive/negative: (B, D) float arrays. Returns a f32 scalar."""
    assert anchor.shape == positive.shape == negative.shape
    B, D = anchor.shape
    itemsize = jnp.dtype(anchor.dtype).itemsize

    # Batch tile size: 3 inputs x 2 pipeline buffers x (TB, D) must stay well
    # under the scoped VMEM limit on every generation -> budget ~12 MiB.
    tile_budget = 12 * 1024 * 1024
    cap = max(8, (tile_budget // (6 * D * itemsize)) // 8 * 8)
    tb = min(512, cap)
    if B <= tb:
        tb = B                      # single full-extent block along the batch
    nb = pl.cdiv(B, tb)             # number of batch blocks

    # Split batch blocks across 2 TensorCores (helps v7x; harmless elsewhere).
    nc = 2 if nb >= 2 else 1
    bpc = pl.cdiv(nb, nc)           # blocks per core

    def in_map(c, i):
        # Clamp fully out-of-range steps onto the last valid block; their rows
        # are masked out inside the kernel.
        return (jnp.minimum(c * bpc + i, nb - 1), 0)

    kernel = functools.partial(
        _triplet_loss_kernel,
        margin=float(margin), blocks_per_core=bpc, block_rows=tb, batch=B)

    cost = pl.CostEstimate(
        flops=8 * B * D,
        transcendentals=0,
        bytes_accessed=3 * B * D * itemsize + nc * _ACC_ROWS * _ACC_LANES * 4)

    acc = pl.pallas_call(
        kernel,
        out_shape=jax.ShapeDtypeStruct((nc * _ACC_ROWS, _ACC_LANES), jnp.float32),
        grid=(nc, bpc),
        in_specs=[
            pl.BlockSpec((tb, D), in_map),
            pl.BlockSpec((tb, D), in_map),
            pl.BlockSpec((tb, D), in_map),
        ],
        out_specs=pl.BlockSpec((_ACC_ROWS, _ACC_LANES), lambda c, i: (c, 0)),
        compiler_params=pltpu.CompilerParams(
            dimension_semantics=("parallel", "arbitrary"),
            vmem_limit_bytes=32 * 1024 * 1024),
        cost_estimate=cost,
    )(anchor, positive, negative)

    # Every element of core c's (8,128) tile equals that core's partial sum;
    # pick one element per core and reduce. Divide by B exactly once.
    total = jnp.sum(acc[::_ACC_ROWS, 0])
    return total / B if size_average else total


def _triplet_loss_ref(anchor, positive, negative, margin=MARGIN, size_average=True):
    dp = jnp.sum((anchor - positive) ** 2, axis=1)
    dn = jnp.sum((anchor - negative) ** 2, axis=1)
    losses = jnp.maximum(dp - dn + margin, 0.0)
    return jnp.mean(losses) if size_average else jnp.sum(losses)


if __name__ == "__main__":
    key = jax.random.PRNGKey(0)
    k1, k2, k3, k4, k5, k6 = jax.random.split(key, 6)

    # 1) Small embedding shape implied by the module (batch=8, hidden=32).
    B, D = 8, 32
    a = jax.random.normal(k1, (B, D), dtype=jnp.float32)
    p = jax.random.normal(k2, (B, D), dtype=jnp.float32)
    n = jax.random.normal(k3, (B, D), dtype=jnp.float32)
    out = triplet_loss(a, p, n)
    jax.block_until_ready(out)
    ref = _triplet_loss_ref(a, p, n)
    assert jnp.allclose(out, ref, atol=1e-5, rtol=1e-5), (out, ref)

    # 2) Larger, non-divisible batch: exercises batch tiling, the 2-way
    #    "parallel" split, index clamping and padded-row masking.
    B2, D2 = 1100, 128
    a2 = jax.random.normal(k4, (B2, D2), dtype=jnp.float32)
    p2 = jax.random.normal(k5, (B2, D2), dtype=jnp.float32)
    n2 = jax.random.normal(k6, (B2, D2), dtype=jnp.float32)
    out_mean = triplet_loss(a2, p2, n2)
    out_sum = triplet_loss(a2, p2, n2, size_average=False)
    jax.block_until_ready((out_mean, out_sum))
    ref_mean = _triplet_loss_ref(a2, p2, n2)
    ref_sum = _triplet_loss_ref(a2, p2, n2, size_average=False)
    assert jnp.allclose(out_mean, ref_mean, atol=1e-4, rtol=1e-4), (out_mean, ref_mean)
    assert jnp.allclose(out_sum, ref_sum, atol=1e-2, rtol=1e-4), (out_sum, ref_sum)

    print("KERNEL_OK")
</pallas_src>

<mosaic_0001>
module attributes {stable_mosaic.version = 11 : i64} {
  func.func @_triplet_loss_kernel(%arg0: i32, %arg1: i32, %arg2: memref<8x32xf32, #tpu.memory_space<vmem>>, %arg3: memref<8x32xf32, #tpu.memory_space<vmem>>, %arg4: memref<8x32xf32, #tpu.memory_space<vmem>>, %arg5: memref<8x128xf32, #tpu.memory_space<vmem>>) attributes {dimension_semantics = [#tpu.dimension_semantics<parallel>, #tpu.dimension_semantics<arbitrary>], iteration_bounds = array<i64: 1, 1>, scalar_prefetch = 0 : i64, scratch_operands = 0 : i64, tpu.core_type = #tpu.core_type<tc>, window_params = [{transform_indices = @transform_0, window_bounds = array<i64: 8, 32>}, {transform_indices = @transform_1, window_bounds = array<i64: 8, 32>}, {transform_indices = @transform_2, window_bounds = array<i64: 8, 32>}, {transform_indices = @transform_3, window_bounds = array<i64: 8, 128>}]} {
    %c0_i32 = arith.constant 0 : i32
    %0 = arith.cmpi eq, %arg1, %c0_i32 : i32
    %1 = arith.extui %0 : i1 to i32
    %c0_i32_0 = arith.constant 0 : i32
    %2 = arith.cmpi ne, %1, %c0_i32_0 : i32
    scf.if %2 {
      %cst_15 = arith.constant 0.000000e+00 : f32
      %33 = vector.broadcast %cst_15 : f32 to vector<8x128xf32>
      %c0_16 = arith.constant 0 : index
      %c0_17 = arith.constant 0 : index
      %34 = vector.load %arg5[%c0_16, %c0_17] : memref<8x128xf32, #tpu.memory_space<vmem>>, vector<8x128xf32>
      tpu.vector_store %arg5[%c0_16, %c0_17], %33 {strides = array<i32>} : memref<8x128xf32, #tpu.memory_space<vmem>>, vector<8x128xf32>,
    } else {
    }
    %c0 = arith.constant 0 : index
    %c0_1 = arith.constant 0 : index
    %3 = vector.load %arg2[%c0, %c0_1] : memref<8x32xf32, #tpu.memory_space<vmem>>, vector<8x32xf32>
    %c0_2 = arith.constant 0 : index
    %c0_3 = arith.constant 0 : index
    %4 = vector.load %arg3[%c0_2, %c0_3] : memref<8x32xf32, #tpu.memory_space<vmem>>, vector<8x32xf32>
    %c0_4 = arith.constant 0 : index
    %c0_5 = arith.constant 0 : index
    %5 = vector.load %arg4[%c0_4, %c0_5] : memref<8x32xf32, #tpu.memory_space<vmem>>, vector<8x32xf32>
    %6 = arith.subf %3, %4 : vector<8x32xf32>
    %7 = arith.subf %3, %5 : vector<8x32xf32>
    %8 = arith.mulf %6, %6 : vector<8x32xf32>
    %9 = arith.mulf %7, %7 : vector<8x32xf32>
    %10 = arith.subf %8, %9 : vector<8x32xf32>
    %cst = arith.constant dense<0.000000e+00> : vector<8xf32>
    %11 = vector.multi_reduction <add>, %10, %cst [1] : vector<8x32xf32> to vector<8xf32>
    %12 = vector.shape_cast %11 : vector<8xf32> to vector<8x1xf32>
    %cst_6 = arith.constant 1.000000e-01 : f32
    %13 = vector.broadcast %cst_6 : f32 to vector<8x1xf32>
    %14 = arith.addf %12, %13 : vector<8x1xf32>
    %cst_7 = arith.constant 0.000000e+00 : f32
    %15 = vector.broadcast %cst_7 : f32 to vector<8x1xf32>
    %16 = arith.maximumf %14, %15 : vector<8x1xf32>
    %c1_i32 = arith.constant 1 : i32
    %17 = arith.muli %arg0, %c1_i32 : i32
    %18 = arith.addi %17, %arg1 : i32
    %c8_i32 = arith.constant 8 : i32
    %19 = arith.muli %18, %c8_i32 : i32
    %20 = tpu.iota {dimensions = array<i32: 0>} : vector<8x1xi32>
    %21 = vector.broadcast %19 : i32 to vector<8x1xi32>
    %22 = arith.addi %21, %20 : vector<8x1xi32>
    %c8_i32_8 = arith.constant 8 : i32
    %23 = vector.broadcast %c8_i32_8 : i32 to vector<8x1xi32>
    %24 = arith.cmpi slt, %22, %23 : vector<8x1xi32>
    %cst_9 = arith.constant 0.000000e+00 : f32
    %25 = vector.broadcast %cst_9 : f32 to vector<8x1xf32>
    %26 = arith.select %24, %16, %25 : vector<8x1xi1>, vector<8x1xf32>
    %c0_10 = arith.constant 0 : index
    %c0_11 = arith.constant 0 : index
    %27 = vector.load %arg5[%c0_10, %c0_11] : memref<8x128xf32, #tpu.memory_space<vmem>>, vector<8x128xf32>
    %cst_12 = arith.constant dense<0.000000e+00> : vector<1xf32>
    %28 = vector.multi_reduction <add>, %26, %cst_12 [0] : vector<8x1xf32> to vector<1xf32>
    %29 = vector.shape_cast %28 : vector<1xf32> to vector<1x1xf32>
    %30 = vector.broadcast %29 : vector<1x1xf32> to vector<8x128xf32>
    %31 = arith.addf %27, %30 : vector<8x128xf32>
    %c0_13 = arith.constant 0 : index
    %c0_14 = arith.constant 0 : index
    %32 = vector.load %arg5[%c0_13, %c0_14] : memref<8x128xf32, #tpu.memory_space<vmem>>, vector<8x128xf32>
    tpu.vector_store %arg5[%c0_13, %c0_14], %31 {strides = array<i32>} : memref<8x128xf32, #tpu.memory_space<vmem>>, vector<8x128xf32>,
    return
  }
  func.func @transform_0(%arg0: i32, %arg1: i32) -> (i32, i32) {
    %c1_i32 = arith.constant 1 : i32
    %0 = arith.muli %arg0, %c1_i32 : i32
    %1 = arith.addi %0, %arg1 : i32
    %c0_i32 = arith.constant 0 : i32
    %2 = arith.minsi %1, %c0_i32 : i32
    %c0_i32_0 = arith.constant 0 : i32
    %c0_i32_1 = arith.constant 0 : i32
    return %2, %c0_i32_0 : i32, i32
  }
  func.func @transform_1(%arg0: i32, %arg1: i32) -> (i32, i32) {
    %c1_i32 = arith.constant 1 : i32
    %0 = arith.muli %arg0, %c1_i32 : i32
    %1 = arith.addi %0, %arg1 : i32
    %c0_i32 = arith.constant 0 : i32
    %2 = arith.minsi %1, %c0_i32 : i32
    %c0_i32_0 = arith.constant 0 : i32
    %c0_i32_1 = arith.constant 0 : i32
    return %2, %c0_i32_0 : i32, i32
  }
  func.func @transform_2(%arg0: i32, %arg1: i32) -> (i32, i32) {
    %c1_i32 = arith.constant 1 : i32
    %0 = arith.muli %arg0, %c1_i32 : i32
    %1 = arith.addi %0, %arg1 : i32
    %c0_i32 = arith.constant 0 : i32
    %2 = arith.minsi %1, %c0_i32 : i32
    %c0_i32_0 = arith.constant 0 : i32
    %c0_i32_1 = arith.constant 0 : i32
    return %2, %c0_i32_0 : i32, i32
  }
  func.func @transform_3(%arg0: i32, %arg1: i32) -> (i32, i32) {
    %c0_i32 = arith.constant 0 : i32
    %c0_i32_0 = arith.constant 0 : i32
    return %arg0, %c0_i32 : i32, i32
  }
}

</mosaic_0001>

<llo_original>
// kernel: tpu_custom_call.1
$region0: #{tpu_custom_call.1}
  #allocation0 [shape = 'u32[]', space=smem, size = 0x4, offset = 0x4, fixed_abs, tag = 'smem constant byte address 0x4 - core index']
  #allocation1 [shape = 'u32[72,128]{1,0:T(1,128)}', space=vmem, size = 0x9000, scoped, tag = 'internal scratch']
  %s0 = inlined_call_operand.hbm [shape: f32[8,32], index: 0, kind: input, shape index: {}]
  %s1 = inlined_call_operand.hbm [shape: f32[8,32], index: 1, kind: input, shape index: {}]
  %s2 = inlined_call_operand.hbm [shape: f32[8,32], index: 2, kind: input, shape index: {}]
  %s3 = inlined_call_operand.hbm [shape: f32[8,128], index: 3, kind: output, shape index: {}]
  %s4 = sld [smem:[#allocation0]]
  $region38: #{tpu_custom_call.1} parent=0
    _
  %s6 = ssub.s32 1, %s4
  %s7 = scalar_select 0, %s6, %s4
  $region1: #{tpu_custom_call.1} parent=0
    #allocation2 [shape = 'u8[4096]{0}', space=vmem, size = 0x1000, scoped, tag = 'input window, operand 0, single buffered']
    #allocation3 [shape = 's32[1]{0}', space=sflag, size = 0x4, scoped, tag = 'scoped memory for tpu_custom_call.1']
    #allocation4 [shape = 's32[1]{0}', space=sflag, size = 0x4, scoped, tag = 'scoped memory for tpu_custom_call.1']
    #allocation5 [shape = 'u8[4096]{0}', space=vmem, size = 0x1000, scoped, tag = 'input window, operand 1, single buffered']
    #allocation6 [shape = 's32[1]{0}', space=sflag, size = 0x4, scoped, tag = 'scoped memory for tpu_custom_call.1']
    #allocation7 [shape = 'u8[4096]{0}', space=vmem, size = 0x1000, scoped, tag = 'input window, operand 2, single buffered']
    #allocation8 [shape = 'u8[4096]{0}', space=vmem, size = 0x1000, scoped, tag = 'output window, operand 0, single buffered']
    %8 = vsyncpa [#allocation3], 0
    %9 = vsyncpa [#allocation6], 0
    %10 = vsyncpa [#allocation4], 0
    // Predicated region
    $region2: #{tpu_custom_call.1} parent=1 // pred_check
      _
    $region3: #{tpu_custom_call.1} parent=1 // pred_check_branch
      %12 = sbr.rel (0) target = $region5
    $region4: #{tpu_custom_call.1} parent=1 // pred_region
      %s13 = sadd.s32 0, 0
      %p14 = scmp.lt.s32.totalorder %s13, 0
      %s15 = scalar_select %p14, %s13, 0
      %17 = vsyncadd [#allocation3], 0
      %s18 = smul.addr %s15, 8
      %s19 = scalar_lea.hbm %s0, %s18
      %s21 = sshll.u32 %s19, 4
      %s22 = int_to_ptr.hbm [resolvable:$true] %s21
      %s23 = sshll.u32 [#allocation2], 4
      %s24 = int_to_ptr.vmem [resolvable:$true] %s23
      %26 = dma.hbm_to_vmem [thread:$0]  %s22, 128, %s24, [#allocation3]
    $region5: #{tpu_custom_call.1} parent=1 // pred_fallthru
      _
    // Predicated region
    $region6: #{tpu_custom_call.1} parent=1 // pred_check
      _
    $region7: #{tpu_custom_call.1} parent=1 // pred_check_branch
      %28 = sbr.rel (0) target = $region9
    $region8: #{tpu_custom_call.1} parent=1 // pred_region
      %s29 = sadd.s32 0, 0
      %p30 = scmp.lt.s32.totalorder %s29, 0
      %s31 = scalar_select %p30, %s29, 0
      %33 = vsyncadd [#allocation6], 0
      %s34 = smul.addr %s31, 8
      %s35 = scalar_lea.hbm %s1, %s34
      %s37 = sshll.u32 %s35, 4
      %s38 = int_to_ptr.hbm [resolvable:$true] %s37
      %s39 = sshll.u32 [#allocation5], 4
      %s40 = int_to_ptr.vmem [resolvable:$true] %s39
      %42 = dma.hbm_to_vmem [thread:$0]  %s38, 128, %s40, [#allocation6]
    $region9: #{tpu_custom_call.1} parent=1 // pred_fallthru
      _
    // Predicated region
    $region10: #{tpu_custom_call.1} parent=1 // pred_check
      _
    $region11: #{tpu_custom_call.1} parent=1 // pred_check_branch
      %44 = sbr.rel (0) target = $region13
    $region12: #{tpu_custom_call.1} parent=1 // pred_region
      %s45 = sadd.s32 0, 0
      %p46 = scmp.lt.s32.totalorder %s45, 0
      %s47 = scalar_select %p46, %s45, 0
      %49 = vsyncadd [#allocation6], 0
      %s50 = smul.addr %s47, 8
      %s51 = scalar_lea.hbm %s2, %s50
      %s53 = sshll.u32 %s51, 4
      %s54 = int_to_ptr.hbm [resolvable:$true] %s53
      %s55 = sshll.u32 [#allocation7], 4
      %s56 = int_to_ptr.vmem [resolvable:$true] %s55
      %58 = dma.hbm_to_vmem [thread:$0]  %s54, 128, %s56, [#allocation6]
    $region13: #{tpu_custom_call.1} parent=1 // pred_fallthru
      _
    // Predicated region
    $region14: #{tpu_custom_call.1} parent=1 // pred_check
      _
    $region15: #{tpu_custom_call.1} parent=1 // pred_check_branch
      %60 = sbr.rel (0) target = $region17
    $region16: #{tpu_custom_call.1} parent=1 // pred_region
      %62 = dma.done [#allocation3], 128
    $region17: #{tpu_custom_call.1} parent=1 // pred_fallthru
      _
    // Predicated region
    $region18: #{tpu_custom_call.1} parent=1 // pred_check
      _
    $region19: #{tpu_custom_call.1} parent=1 // pred_check_branch
      %64 = sbr.rel (0) target = $region21
    $region20: #{tpu_custom_call.1} parent=1 // pred_region
      %66 = dma.done [#allocation6], 128
    $region21: #{tpu_custom_call.1} parent=1 // pred_fallthru
      _
    // Predicated region
    $region22: #{tpu_custom_call.1} parent=1 // pred_check
      _
    $region23: #{tpu_custom_call.1} parent=1 // pred_check_branch
      %68 = sbr.rel (0) target = $region25
    $region24: #{tpu_custom_call.1} parent=1 // pred_region
      %70 = dma.done [#allocation6], 128
    $region25: #{tpu_custom_call.1} parent=1 // pred_fallthru
      _
    %s71 = sadd.s32 0, 0
    %p72 = scmp.lt.s32.totalorder %s71, 0
    %s73 = scalar_select %p72, %s71, 0
    %s74 = sadd.s32 0, 0
    %p75 = scmp.lt.s32.totalorder %s74, 0
    %s76 = scalar_select %p75, %s74, 0
    %s77 = sadd.s32 0, 0
    %p78 = scmp.lt.s32.totalorder %s77, 0
    %s79 = scalar_select %p78, %s77, 0
    %p80 = scmp.eq.s32.totalorder 0, 0
    // Predicated region
    $region26: #{tpu_custom_call.1} parent=1 // pred_check
      %p81 = pneg %p80
    $region27: #{tpu_custom_call.1} parent=1 // pred_check_branch
      %83 = sbr.rel (%p81) target = $region29
    $region28: #{tpu_custom_call.1} parent=1 // pred_region
      %84 = vst [vmem:[#allocation8] sm:$0xff] 0.0
    $region29: #{tpu_custom_call.1} parent=1 // pred_fallthru
      _
    %v85 = vld [vmem:[#allocation2] sm:$0xff]
    %v86 = vld [vmem:[#allocation5] sm:$0xff]
    %v87 = vld [vmem:[#allocation7] sm:$0xff]
    %v88 = vsub.f32 %v85, %v86
    %v89 = vsub.f32 %v85, %v87
    %v90 = vmul.f32 %v88, %v88
    %v91 = vmul.f32 %v89, %v89
    %v92 = vsub.f32 %v90, %v91
    %vm93 = vcmask 261120
    %v94 = vsel %vm93, %v92, 0.0
    %95 = vadd.xlane.f32.xlu0 %v94
    %v96 = vpop.xlane.xlu0 %95
    %v97 = vadd.f32 %v96, 0.1
    %v98 = vmax.f32 %v97, 0.0
    %s99 = sadd.s32 0, 0
    %s100 = smul.u32 %s99, 8
    %v101 = vlaneseq
    %v102 = vshrl.u32 %v101, 7
    %v103 = vstv %s100
    %v104 = vadd.s32 %v103, %v102
    %vm105 = vcmp.lt.s32.totalorder %v104, 8
    %v106 = vsel %vm105, %v98, 0.0
    %v107 = vld [vmem:[#allocation8] sm:$0xff]
    %v108 = vrot.slane %v106, 4
    %v109 = vadd.f32 %v106, %v108
    %v110 = vrot.slane %v109, 2
    %v111 = vadd.f32 %v109, %v110
    %v112 = vrot.slane %v111, 1
    %v113 = vadd.f32 %v111, %v112
    %v114 = vadd.f32 %v107, %v113
    %115 = vst [vmem:[#allocation8] sm:$0xff] %v114
    // Predicated region
    $region30: #{tpu_custom_call.1} parent=1 // pred_check
      _
    $region31: #{tpu_custom_call.1} parent=1 // pred_check_branch
      %117 = sbr.rel (0) target = $region33
    $region32: #{tpu_custom_call.1} parent=1 // pred_region
      %119 = vsyncadd [#allocation4], 0
      %s121 = sshll.u32 [#allocation8], 4
      %s122 = int_to_ptr.vmem [resolvable:$true] %s121
      %s123 = sshll.u32 %s3, 4
      %s124 = int_to_ptr.hbm [resolvable:$true] %s123
      %126 = dma.vmem_to_hbm [thread:$0]  %s122, 128, %s124, [#allocation4]
    $region33: #{tpu_custom_call.1} parent=1 // pred_fallthru
      _
    // Predicated region
    $region34: #{tpu_custom_call.1} parent=1 // pred_check
      _
    $region35: #{tpu_custom_call.1} parent=1 // pred_check_branch
      %128 = sbr.rel (0) target = $region37
    $region36: #{tpu_custom_call.1} parent=1 // pred_region
      %130 = dma.done [#allocation4], 128
    $region37: #{tpu_custom_call.1} parent=1 // pred_fallthru
      _
    %131 = vsyncpa [#allocation3], 1
    %132 = vsyncpa [#allocation6], 1
    %133 = vsyncpa [#allocation4], 1

</llo_original>
